<compile_context>
chip_gen: v5e
topology: v5e:2x2
jax: 0.10.0
libtpu: 0.0.40
codegen_flags: <defaults>
</compile_context>

<pallas_src>
import jax
import jax.numpy as jnp
from jax.experimental import pallas as pl
from jax.experimental.pallas import tpu as pltpu


def mul_kernel(x_ref, w_ref, o_ref):
    # Elementwise multiply on the VPU; (5, 5) fits inside a single vreg tile.
    o_ref[...] = x_ref[...] * w_ref[...]


def mul_matrix(x: jax.Array, w: jax.Array) -> jax.Array:
    assert x.shape == w.shape, f"shape mismatch: {x.shape} vs {w.shape}"
    M, N = x.shape
    itemsize = jnp.dtype(x.dtype).itemsize
    return pl.pallas_call(
        mul_kernel,
        out_shape=jax.ShapeDtypeStruct((M, N), x.dtype),
        # Gridless whole-array call: cheapest correct form for a tiny op.
        in_specs=[
            pl.BlockSpec(memory_space=pltpu.MemorySpace.VMEM),
            pl.BlockSpec(memory_space=pltpu.MemorySpace.VMEM),
        ],
        out_specs=pl.BlockSpec(memory_space=pltpu.MemorySpace.VMEM),
        cost_estimate=pl.CostEstimate(
            flops=M * N,
            bytes_accessed=3 * M * N * itemsize,  # x in, w in, out
            transcendentals=0,
        ),
    )(x, w)


if __name__ == "__main__":
    # Parameter exactly as the module defines it: torch.ones([5, 5]) * 5.
    w = jnp.full((5, 5), 5.0, dtype=jnp.float32)

    # Dummy input consistent with get_dummy_input_tensor(): randn(5, 5).
    key = jax.random.PRNGKey(0)
    x = jax.random.normal(key, (5, 5), dtype=jnp.float32)

    out = mul_matrix(x, w)
    jax.block_until_ready(out)

    # Correctness check against the plain-JAX reference (elementwise multiply).
    ref = x * w
    assert out.shape == (5, 5), f"bad output shape {out.shape}"
    assert out.dtype == x.dtype, f"bad output dtype {out.dtype}"
    assert jnp.allclose(out, ref, atol=1e-6, rtol=1e-6), "mismatch vs reference"

    print("KERNEL_OK")
</pallas_src>

<mosaic_0001>
module attributes {stable_mosaic.version = 11 : i64} {
  func.func @mul_kernel(%arg0: memref<5x5xf32, #tpu.memory_space<vmem>>, %arg1: memref<5x5xf32, #tpu.memory_space<vmem>>, %arg2: memref<5x5xf32, #tpu.memory_space<vmem>>) attributes {dimension_semantics = [], scalar_prefetch = 0 : i64, scratch_operands = 0 : i64, tpu.core_type = #tpu.core_type<tc>} {
    %c0 = arith.constant 0 : index
    %c0_0 = arith.constant 0 : index
    %0 = vector.load %arg0[%c0, %c0_0] : memref<5x5xf32, #tpu.memory_space<vmem>>, vector<5x5xf32>
    %c0_1 = arith.constant 0 : index
    %c0_2 = arith.constant 0 : index
    %1 = vector.load %arg1[%c0_1, %c0_2] : memref<5x5xf32, #tpu.memory_space<vmem>>, vector<5x5xf32>
    %2 = arith.mulf %0, %1 : vector<5x5xf32>
    %c0_3 = arith.constant 0 : index
    %c0_4 = arith.constant 0 : index
    %3 = vector.load %arg2[%c0_3, %c0_4] : memref<5x5xf32, #tpu.memory_space<vmem>>, vector<5x5xf32>
    tpu.vector_store %arg2[%c0_3, %c0_4], %2 {strides = array<i32>} : memref<5x5xf32, #tpu.memory_space<vmem>>, vector<5x5xf32>,
    return
  }
}

</mosaic_0001>

<llo_original>
// kernel: tpu_custom_call.1
$region0: #{tpu_custom_call.1}
  #allocation0 [shape = 'u32[]', space=smem, size = 0x4, offset = 0x4, fixed_abs, tag = 'smem constant byte address 0x4 - core index']
  #allocation1 [shape = 'u32[72,128]{1,0:T(1,128)}', space=vmem, size = 0x9000, scoped, tag = 'internal scratch']
  %s0 = inlined_call_operand.hbm [shape: f32[5,5], index: 0, kind: input, shape index: {}]
  %s1 = inlined_call_operand.hbm [shape: f32[5,5], index: 1, kind: input, shape index: {}]
  %s2 = inlined_call_operand.hbm [shape: f32[5,5], index: 2, kind: output, shape index: {}]
  %s3 = sld [smem:[#allocation0]]
  $region26: #{tpu_custom_call.1} parent=0
    _
  %s5 = ssub.s32 1, %s3
  %s6 = scalar_select 0, %s5, %s3
  $region1: #{tpu_custom_call.1} parent=0
    #allocation2 [shape = 'u8[4096]{0}', space=vmem, size = 0x1000, scoped, tag = 'input window, operand 0, single buffered']
    #allocation3 [shape = 's32[1]{0}', space=sflag, size = 0x4, scoped, tag = 'scoped memory for tpu_custom_call.1']
    #allocation4 [shape = 's32[1]{0}', space=sflag, size = 0x4, scoped, tag = 'scoped memory for tpu_custom_call.1']
    #allocation5 [shape = 'u8[4096]{0}', space=vmem, size = 0x1000, scoped, tag = 'input window, operand 1, single buffered']
    #allocation6 [shape = 's32[1]{0}', space=sflag, size = 0x4, scoped, tag = 'scoped memory for tpu_custom_call.1']
    #allocation7 [shape = 'u8[4096]{0}', space=vmem, size = 0x1000, scoped, tag = 'output window, operand 0, single buffered']
    %7 = vsyncpa [#allocation3], 0
    %8 = vsyncpa [#allocation6], 0
    %9 = vsyncpa [#allocation4], 0
    // Predicated region
    $region2: #{tpu_custom_call.1} parent=1 // pred_check
      _
    $region3: #{tpu_custom_call.1} parent=1 // pred_check_branch
      %11 = sbr.rel (0) target = $region5
    $region4: #{tpu_custom_call.1} parent=1 // pred_region
      %13 = vsyncadd [#allocation3], 0
      %s15 = sshll.u32 %s0, 4
      %s16 = int_to_ptr.hbm [resolvable:$true] %s15
      %s17 = sshll.u32 [#allocation2], 4
      %s18 = int_to_ptr.vmem [resolvable:$true] %s17
      %20 = dma.hbm_to_vmem [thread:$0]  %s16, 128, %s18, [#allocation3]
    $region5: #{tpu_custom_call.1} parent=1 // pred_fallthru
      _
    // Predicated region
    $region6: #{tpu_custom_call.1} parent=1 // pred_check
      _
    $region7: #{tpu_custom_call.1} parent=1 // pred_check_branch
      %22 = sbr.rel (0) target = $region9
    $region8: #{tpu_custom_call.1} parent=1 // pred_region
      %24 = vsyncadd [#allocation6], 0
      %s26 = sshll.u32 %s1, 4
      %s27 = int_to_ptr.hbm [resolvable:$true] %s26
      %s28 = sshll.u32 [#allocation5], 4
      %s29 = int_to_ptr.vmem [resolvable:$true] %s28
      %31 = dma.hbm_to_vmem [thread:$0]  %s27, 128, %s29, [#allocation6]
    $region9: #{tpu_custom_call.1} parent=1 // pred_fallthru
      _
    // Predicated region
    $region10: #{tpu_custom_call.1} parent=1 // pred_check
      _
    $region11: #{tpu_custom_call.1} parent=1 // pred_check_branch
      %33 = sbr.rel (0) target = $region13
    $region12: #{tpu_custom_call.1} parent=1 // pred_region
      %35 = dma.done [#allocation3], 128
    $region13: #{tpu_custom_call.1} parent=1 // pred_fallthru
      _
    // Predicated region
    $region14: #{tpu_custom_call.1} parent=1 // pred_check
      _
    $region15: #{tpu_custom_call.1} parent=1 // pred_check_branch
      %37 = sbr.rel (0) target = $region17
    $region16: #{tpu_custom_call.1} parent=1 // pred_region
      %39 = dma.done [#allocation6], 128
    $region17: #{tpu_custom_call.1} parent=1 // pred_fallthru
      _
    %v40 = vld [vmem:[#allocation2] sm:$0x1f]
    %v41 = vld [vmem:[#allocation5] sm:$0x1f]
    %v42 = vmul.f32 %v40, %v41
    %vm43 = vcmask 36864
    %44 = vst.msk [vmem:[#allocation7] sm:$0x1f] %vm43, %v42
    // Predicated region
    $region18: #{tpu_custom_call.1} parent=1 // pred_check
      _
    $region19: #{tpu_custom_call.1} parent=1 // pred_check_branch
      %46 = sbr.rel (0) target = $region21
    $region20: #{tpu_custom_call.1} parent=1 // pred_region
      %48 = vsyncadd [#allocation4], 0
      %s50 = sshll.u32 [#allocation7], 4
      %s51 = int_to_ptr.vmem [resolvable:$true] %s50
      %s52 = sshll.u32 %s2, 4
      %s53 = int_to_ptr.hbm [resolvable:$true] %s52
      %55 = dma.vmem_to_hbm [thread:$0]  %s51, 128, %s53, [#allocation4]
    $region21: #{tpu_custom_call.1} parent=1 // pred_fallthru
      _
    // Predicated region
    $region22: #{tpu_custom_call.1} parent=1 // pred_check
      _
    $region23: #{tpu_custom_call.1} parent=1 // pred_check_branch
      %57 = sbr.rel (0) target = $region25
    $region24: #{tpu_custom_call.1} parent=1 // pred_region
      %59 = dma.done [#allocation4], 128
    $region25: #{tpu_custom_call.1} parent=1 // pred_fallthru
      _
    %60 = vsyncpa [#allocation3], 1
    %61 = vsyncpa [#allocation6], 1
    %62 = vsyncpa [#allocation4], 1

</llo_original>
